<compile_context>
chip_gen: v6e
topology: v6e:2x2x1
jax: 0.10.0
libtpu: 0.0.40
codegen_flags: <defaults>
</compile_context>

<pallas_src>
import functools

import jax
import jax.numpy as jnp
from jax import lax
from jax.experimental import pallas as pl
from jax.experimental.pallas import tpu as pltpu


_NEG_BIG = -1e30              # finite "-inf": masked / init values never NaN
_LN2 = 0.6931471805599453
_LOG2E = 1.4426950408889634
_EPS2 = 1e-24                 # (torch F.normalize eps = 1e-12) squared


def _infonce_rowloss_kernel(q_ref, p_ref, out_ref, qn_sc, m_sc, l_sc, d_sc, *,
                            scale, n_valid, n_padded, tile_q, tile_k):
    """Per-row CE of logits = norm(q) @ norm(p).T / T with labels = arange(N).

    Grid: (row tiles, key/column tiles).  The column axis is the innermost
    ("arbitrary") reduction axis with an online base-2 logsumexp in VMEM
    scratch (m_sc, l_sc).  qn_sc caches the normalized / (1/T*log2e)-scaled /
    matmul-dtype query tile, filled once per row tile.
    """
    i = pl.program_id(0)
    j = pl.program_id(1)
    n_col_tiles = pl.num_programs(1)

    @pl.when(j == 0)
    def _init():
        m_sc[...] = jnp.full(m_sc.shape, _NEG_BIG, dtype=m_sc.dtype)
        l_sc[...] = jnp.zeros(l_sc.shape, dtype=l_sc.dtype)
        d_sc[...] = jnp.zeros(d_sc.shape, dtype=d_sc.dtype)
        # Normalize the query rows once per row tile (rsqrt -> EUP) and fold
        # (1/T)*log2(e) in: the O(N^2) logits never see a divide and the
        # online LSE can use exp2 directly.
        q = q_ref[...].astype(jnp.float32)
        q_inv = lax.rsqrt(
            jnp.maximum(jnp.sum(q * q, axis=-1, keepdims=True),
                        jnp.float32(_EPS2)))
        qn_sc[...] = (q * (q_inv * jnp.float32(scale))).astype(qn_sc.dtype)

    # (tile_q, tile_k) logits in log2 units.  Keys were pre-normalized (and
    # optionally pre-cast to bf16) in the wrapper; contracting the last dims
    # avoids materializing a key transpose before the MXU.  Accumulation is
    # always f32 via preferred_element_type.
    s = lax.dot_general(qn_sc[...], p_ref[...],
                        dimension_numbers=(((1,), (1,)), ((), ())),
                        preferred_element_type=jnp.float32)

    # Positive (diagonal) logit: query row i*tile_q + r pairs with the key of
    # the same global index.  tile_k is a multiple of tile_q, so the whole
    # diagonal of this row tile lives in exactly one column tile; extract it
    # from s (bit-consistent with the matmul) only there.
    row0 = i * tile_q
    has_diag = jnp.logical_and(row0 >= j * tile_k, row0 < (j + 1) * tile_k)

    @pl.when(has_diag)
    def _diag():
        off = row0 - j * tile_k
        rows = lax.broadcasted_iota(jnp.int32, s.shape, 0)
        cols = lax.broadcasted_iota(jnp.int32, s.shape, 1)
        d_sc[...] = jnp.sum(jnp.where(cols == rows + off, s, 0.0),
                            axis=-1, keepdims=True)

    if n_padded != n_valid:
        # Mask padded key columns out of the logsumexp.  The mask is row
        # independent, so build it as a (1, tile_k) bias and pay a single
        # broadcast add over the tile (this branch is static: only traced
        # when the wrapper actually padded the inputs).
        col = j * tile_k + lax.broadcasted_iota(jnp.int32, (1, tile_k), 1)
        s = s + jnp.where(col < n_valid, 0.0, _NEG_BIG).astype(jnp.float32)

    # Online (flash-style) logsumexp in base 2.
    m_prev = m_sc[...]
    m_new = jnp.maximum(m_prev, jnp.max(s, axis=-1, keepdims=True))
    l_sc[...] = (l_sc[...] * jnp.exp2(m_prev - m_new)
                 + jnp.sum(jnp.exp2(s - m_new), axis=-1, keepdims=True))
    m_sc[...] = m_new

    @pl.when(j == n_col_tiles - 1)
    def _finalize():
        # per-row CE with labels = arange:
        #   loss = ln2 * (m2 + log2(l2) - d2) = ln2 * (m2 - d2) + ln(l2)
        out_ref[...] = (jnp.float32(_LN2) * (m_sc[...] - d_sc[...])
                        + jnp.log(l_sc[...])).astype(out_ref.dtype)


def _round_up(x, m):
    return (x + m - 1) // m * m


def _choose_tiles(n, d, q_itemsize, mm_itemsize, budget_bytes):
    """D- and VMEM-aware (tile_q, tile_k); tile_k is a pow2 multiple of tile_q."""
    gran = 16 if mm_itemsize < 4 else 8   # bf16 packs 2 rows / sublane

    def est(tq, tk):
        return (2 * tq * d * q_itemsize        # query block, double-buffered
                + 2 * tk * d * mm_itemsize     # key block, double-buffered
                + tq * d * mm_itemsize         # cached qn scratch
                + 4 * tq * tk * 4              # s / exp / iota temporaries
                + 16 * tq * 4)                 # m / l / d / out

    # Row tile: <= 256, but >= 2 row tiles when possible so both v7x
    # TensorCores get work via the "parallel" row axis; shrink for huge D.
    tq = min(256, _round_up(max(-(-n // 2), 1), gran))
    while tq > gran and est(tq, tq) > budget_bytes:
        tq = _round_up(tq // 2, gran)
    tq = max(gran, tq)

    # Column tile: largest power-of-two multiple of tile_q inside the budget
    # (bigger inner tiles amortize ~0.35us/step grid overhead and improve DMA
    # pipelining of the streamed key tiles).
    n_ceil = _round_up(n, tq)
    ratio = 1
    while (tq * ratio * 2 <= min(2048, n_ceil)
           and est(tq, tq * ratio * 2) <= budget_bytes):
        ratio *= 2
    return tq, tq * ratio


def _per_row_cross_entropy(query, keys, temperature, *, tile=None,
                           use_bf16_matmul=True):
    """Per-row CE of norm(query) @ norm(keys).T / T with labels = arange(N)."""
    n, d = query.shape
    mm_dtype = jnp.bfloat16 if use_bf16_matmul else jnp.float32
    q_item = jnp.dtype(query.dtype).itemsize
    mm_item = jnp.dtype(mm_dtype).itemsize

    # Pre-normalize the keys ONCE (they are streamed once per row tile by the
    # kernel) and cast them to the matmul dtype here, so the repeated key-tile
    # HBM traffic is halved on the bf16 fast path.
    keys_f32 = keys.astype(jnp.float32)
    k_inv = lax.rsqrt(jnp.maximum(
        jnp.sum(keys_f32 * keys_f32, axis=-1, keepdims=True),
        jnp.float32(_EPS2)))
    keys_n = (keys_f32 * k_inv).astype(mm_dtype)

    budget = 28 * 1024 * 1024
    if tile is None:
        tile_q, tile_k = _choose_tiles(n, d, q_item, mm_item, budget)
    else:
        gran = 16 if mm_item < 4 else 8
        tile_q = tile_k = max(gran, _round_up(int(tile), gran))

    n_pad = _round_up(n, tile_k)              # tile_k is a multiple of tile_q
    if n_pad != n:
        query = jnp.pad(query, ((0, n_pad - n), (0, 0)))
        keys_n = jnp.pad(keys_n, ((0, n_pad - n), (0, 0)))
    r_rows = n_pad // tile_q
    r_cols = n_pad // tile_k

    kernel = functools.partial(
        _infonce_rowloss_kernel,
        scale=(1.0 / float(temperature)) * _LOG2E,
        n_valid=n, n_padded=n_pad, tile_q=tile_q, tile_k=tile_k)

    out = pl.pallas_call(
        kernel,
        out_shape=jax.ShapeDtypeStruct((n_pad, 1), jnp.float32),
        grid_spec=pltpu.PrefetchScalarGridSpec(
            num_scalar_prefetch=0,
            grid=(r_rows, r_cols),
            in_specs=[
                pl.BlockSpec((tile_q, d), lambda i, j: (i, 0)),   # query rows
                pl.BlockSpec((tile_k, d), lambda i, j: (j, 0)),   # key rows
            ],
            out_specs=pl.BlockSpec((tile_q, 1), lambda i, j: (i, 0)),
            scratch_shapes=[
                pltpu.VMEM((tile_q, d), mm_dtype),     # cached qn
                pltpu.VMEM((tile_q, 1), jnp.float32),  # m (running max, log2)
                pltpu.VMEM((tile_q, 1), jnp.float32),  # l (running sum)
                pltpu.VMEM((tile_q, 1), jnp.float32),  # diag logit (log2)
            ]),
        compiler_params=pltpu.CompilerParams(
            dimension_semantics=("parallel", "arbitrary"),
            vmem_limit_bytes=48 * 1024 * 1024),
        cost_estimate=pl.CostEstimate(
            flops=2 * n_pad * n_pad * d + 8 * n_pad * d,
            transcendentals=n_pad * n_pad + 2 * n_pad,
            bytes_accessed=(n_pad * d * q_item              # query: one pass
                            + r_rows * n_pad * d * mm_item  # keys: r passes
                            + n_pad * 4)),
    )(query, keys_n)
    return out[:n, 0]


def info_nce(query, positive_key, negative_keys=None, temperature=0.1,
             reduction="mean", negative_mode="unpaired", symmetric=False,
             tile=None, use_bf16_matmul=True):
    """InfoNCE loss — negative_keys=None path of the reference module.

    use_bf16_matmul=True is the fast path (bf16 MXU operands, f32
    accumulation); set False for strict f32 logits matching torch numerics.
    """
    if query.ndim != 2 or positive_key.ndim != 2:
        raise ValueError("<query> and <positive_key> must have 2 dimensions.")
    if query.shape != positive_key.shape:
        raise ValueError("<query> and <positive_key> must have the same shape.")
    if negative_keys is not None:
        # TODO(synk): the reference's negative_keys branch never returns
        # (missing `return` in the PyTorch source), so it yields None; that
        # buggy path is not reproduced here.
        raise NotImplementedError("negative_keys path is not implemented")

    per_row = _per_row_cross_entropy(
        query, positive_key, temperature, tile=tile,
        use_bf16_matmul=use_bf16_matmul)

    if symmetric:
        # cross_entropy(logits.T, labels) == same kernel with swapped args
        # (avoids materializing an NxN transpose through the XLU).
        per_row_t = _per_row_cross_entropy(
            positive_key, query, temperature, tile=tile,
            use_bf16_matmul=use_bf16_matmul)
        per_row = 0.5 * per_row + 0.5 * per_row_t

    if reduction == "mean":
        return jnp.mean(per_row)
    if reduction == "sum":
        return jnp.sum(per_row)
    if reduction == "none":
        return per_row
    raise ValueError("reduction must be one of ['none', 'sum', 'mean']")


def _reference(query, positive_key, temperature=0.1, reduction="mean",
               symmetric=False):
    # Pure-JAX reference of the same path, for verification.
    eps = 1e-12
    qn = query / jnp.maximum(
        jnp.linalg.norm(query, axis=-1, keepdims=True), eps)
    pn = positive_key / jnp.maximum(
        jnp.linalg.norm(positive_key, axis=-1, keepdims=True), eps)
    logits = (qn @ pn.T) / temperature
    labels = jnp.arange(logits.shape[0])

    def ce(lg):
        lse = jax.scipy.special.logsumexp(lg, axis=-1)
        correct = lg[jnp.arange(lg.shape[0]), labels]
        per = lse - correct
        if reduction == "mean":
            return jnp.mean(per)
        if reduction == "sum":
            return jnp.sum(per)
        return per

    if symmetric:
        return 0.5 * ce(logits) + 0.5 * ce(logits.T)
    return ce(logits)


if __name__ == "__main__":
    key = jax.random.PRNGKey(0)
    k_q, k_p, k_q2, k_p2 = jax.random.split(key, 4)

    # Small shapes consistent with the module: batch of 8 embeddings of dim 32.
    N, D = 8, 32
    query = jax.random.normal(k_q, (N, D), dtype=jnp.float32)
    positive_key = jax.random.normal(k_p, (N, D), dtype=jnp.float32)

    # f32 MXU path (tight tolerance vs. the pure-JAX reference).
    loss = jax.block_until_ready(
        info_nce(query, positive_key, temperature=0.1, reduction="mean",
                 use_bf16_matmul=False))
    ref = _reference(query, positive_key, temperature=0.1, reduction="mean")
    assert jnp.allclose(loss, ref, atol=1e-4, rtol=1e-4), (loss, ref)

    # Default fast path (bf16 MXU operands, f32 accumulation): logits are
    # intentionally bf16-rounded, so the tolerance is loose.
    loss_bf16 = jax.block_until_ready(
        info_nce(query, positive_key, temperature=0.1, reduction="mean"))
    assert jnp.allclose(loss_bf16, ref, atol=3e-1, rtol=3e-1), (loss_bf16, ref)

    # Symmetric variant (f32 path).
    loss_sym = jax.block_until_ready(
        info_nce(query, positive_key, temperature=0.1, symmetric=True,
                 use_bf16_matmul=False))
    ref_sym = _reference(query, positive_key, temperature=0.1, symmetric=True)
    assert jnp.allclose(loss_sym, ref_sym, atol=1e-4, rtol=1e-4), (loss_sym, ref_sym)

    # Multi-tile online-LSE path with explicit square tiles + column padding:
    # N=40 with 16-row/col tiles -> 3x3 grid, 8 padded key columns masked.
    N2, D2 = 40, 32
    q2 = jax.random.normal(k_q2, (N2, D2), dtype=jnp.float32)
    p2 = jax.random.normal(k_p2, (N2, D2), dtype=jnp.float32)
    loss2 = jax.block_until_ready(
        info_nce(q2, p2, temperature=0.1, reduction="mean", tile=16,
                 use_bf16_matmul=False))
    ref2 = _reference(q2, p2, temperature=0.1, reduction="mean")
    assert jnp.allclose(loss2, ref2, atol=1e-4, rtol=1e-4), (loss2, ref2)

    # Default heuristic on the same inputs: rectangular tiles (tile_k a pow2
    # multiple of tile_q) + >= 2 row tiles; f32 for a tight check.
    loss3 = jax.block_until_ready(
        info_nce(q2, p2, temperature=0.1, reduction="sum",
                 use_bf16_matmul=False))
    ref3 = _reference(q2, p2, temperature=0.1, reduction="sum")
    assert jnp.allclose(loss3, ref3, atol=1e-3, rtol=1e-4), (loss3, ref3)

    print("KERNEL_OK")
</pallas_src>

<mosaic_0001>
module attributes {stable_mosaic.version = 11 : i64} {
  func.func @_infonce_rowloss_kernel(%arg0: i32, %arg1: i32, %arg2: memref<8x32xf32, #tpu.memory_space<vmem>>, %arg3: memref<8x32xf32, #tpu.memory_space<vmem>>, %arg4: memref<8x1xf32, #tpu.memory_space<vmem>>, %arg5: memref<8x32xf32, #tpu.memory_space<vmem>>, %arg6: memref<8x1xf32, #tpu.memory_space<vmem>>, %arg7: memref<8x1xf32, #tpu.memory_space<vmem>>, %arg8: memref<8x1xf32, #tpu.memory_space<vmem>>) attributes {dimension_semantics = [#tpu.dimension_semantics<parallel>, #tpu.dimension_semantics<arbitrary>], iteration_bounds = array<i64: 1, 1>, scalar_prefetch = 0 : i64, scratch_operands = 4 : i64, tpu.core_type = #tpu.core_type<tc>, window_params = [{transform_indices = @transform_0, window_bounds = array<i64: 8, 32>}, {transform_indices = @transform_1, window_bounds = array<i64: 8, 32>}, {transform_indices = @transform_2, window_bounds = array<i64: 8, 1>}]} {
    %c0_i32 = arith.constant 0 : i32
    %0 = arith.cmpi eq, %arg1, %c0_i32 : i32
    %1 = arith.extui %0 : i1 to i32
    %c0_i32_0 = arith.constant 0 : i32
    %2 = arith.cmpi ne, %1, %c0_i32_0 : i32
    scf.if %2 {
      %cst_19 = arith.constant -1.000000e+30 : f32
      %34 = vector.broadcast %cst_19 : f32 to vector<8x1xf32>
      %c0_20 = arith.constant 0 : index
      %c0_21 = arith.constant 0 : index
      %35 = vector.load %arg6[%c0_20, %c0_21] : memref<8x1xf32, #tpu.memory_space<vmem>>, vector<8x1xf32>
      tpu.vector_store %arg6[%c0_20, %c0_21], %34 {strides = array<i32>} : memref<8x1xf32, #tpu.memory_space<vmem>>, vector<8x1xf32>,
      %cst_22 = arith.constant 0.000000e+00 : f32
      %36 = vector.broadcast %cst_22 : f32 to vector<8x1xf32>
      %c0_23 = arith.constant 0 : index
      %c0_24 = arith.constant 0 : index
      %37 = vector.load %arg7[%c0_23, %c0_24] : memref<8x1xf32, #tpu.memory_space<vmem>>, vector<8x1xf32>
      tpu.vector_store %arg7[%c0_23, %c0_24], %36 {strides = array<i32>} : memref<8x1xf32, #tpu.memory_space<vmem>>, vector<8x1xf32>,
      %cst_25 = arith.constant 0.000000e+00 : f32
      %38 = vector.broadcast %cst_25 : f32 to vector<8x1xf32>
      %c0_26 = arith.constant 0 : index
      %c0_27 = arith.constant 0 : index
      %39 = vector.load %arg8[%c0_26, %c0_27] : memref<8x1xf32, #tpu.memory_space<vmem>>, vector<8x1xf32>
      tpu.vector_store %arg8[%c0_26, %c0_27], %38 {strides = array<i32>} : memref<8x1xf32, #tpu.memory_space<vmem>>, vector<8x1xf32>,
      %c0_28 = arith.constant 0 : index
      %c0_29 = arith.constant 0 : index
      %40 = vector.load %arg2[%c0_28, %c0_29] : memref<8x32xf32, #tpu.memory_space<vmem>>, vector<8x32xf32>
      %41 = arith.mulf %40, %40 : vector<8x32xf32>
      %cst_30 = arith.constant dense<0.000000e+00> : vector<8xf32>
      %42 = vector.multi_reduction <add>, %41, %cst_30 [1] : vector<8x32xf32> to vector<8xf32>
      %43 = vector.shape_cast %42 : vector<8xf32> to vector<8x1xf32>
      %cst_31 = arith.constant 1.000000e-24 : f32
      %44 = vector.broadcast %cst_31 : f32 to vector<8x1xf32>
      %45 = arith.maximumf %43, %44 : vector<8x1xf32>
      %46 = math.rsqrt %45 : vector<8x1xf32>
      %cst_32 = arith.constant 14.4269505 : f32
      %47 = vector.broadcast %cst_32 : f32 to vector<8x1xf32>
      %48 = arith.mulf %46, %47 : vector<8x1xf32>
      %49 = vector.broadcast %48 : vector<8x1xf32> to vector<8x32xf32>
      %50 = arith.mulf %40, %49 : vector<8x32xf32>
      %c0_33 = arith.constant 0 : index
      %c0_34 = arith.constant 0 : index
      %51 = vector.load %arg5[%c0_33, %c0_34] : memref<8x32xf32, #tpu.memory_space<vmem>>, vector<8x32xf32>
      tpu.vector_store %arg5[%c0_33, %c0_34], %50 {strides = array<i32>} : memref<8x32xf32, #tpu.memory_space<vmem>>, vector<8x32xf32>,
    } else {
    }
    %c0 = arith.constant 0 : index
    %c0_1 = arith.constant 0 : index
    %3 = vector.load %arg5[%c0, %c0_1] : memref<8x32xf32, #tpu.memory_space<vmem>>, vector<8x32xf32>
    %c0_2 = arith.constant 0 : index
    %c0_3 = arith.constant 0 : index
    %4 = vector.load %arg3[%c0_2, %c0_3] : memref<8x32xf32, #tpu.memory_space<vmem>>, vector<8x32xf32>
    %cst = arith.constant dense<0.000000e+00> : vector<8x8xf32>
    %5 = tpu.matmul %3, %4, %cst {dimension_numbers = #tpu.dot_dimension_numbers<[1], [1], [0], [0], [0, 0, 1, 0], [], []>} : vector<8x32xf32>, vector<8x32xf32>, vector<8x8xf32> -> vector<8x8xf32>
    %c8_i32 = arith.constant 8 : i32
    %6 = arith.muli %arg0, %c8_i32 : i32
    %c8_i32_4 = arith.constant 8 : i32
    %7 = arith.muli %arg1, %c8_i32_4 : i32
    %8 = arith.cmpi sge, %6, %7 : i32
    %c1_i32 = arith.constant 1 : i32
    %9 = arith.addi %arg1, %c1_i32 : i32
    %c8_i32_5 = arith.constant 8 : i32
    %10 = arith.muli %9, %c8_i32_5 : i32
    %11 = arith.cmpi slt, %6, %10 : i32
    %12 = arith.andi %8, %11 : i1
    %13 = arith.extui %12 : i1 to i32
    %c0_i32_6 = arith.constant 0 : i32
    %14 = arith.cmpi ne, %13, %c0_i32_6 : i32
    scf.if %14 {
      %c8_i32_19 = arith.constant 8 : i32
      %34 = arith.muli %arg1, %c8_i32_19 : i32
      %35 = arith.subi %6, %34 : i32
      %36 = tpu.iota {dimensions = array<i32: 0>} : vector<8x8xi32>
      %37 = tpu.iota {dimensions = array<i32: 1>} : vector<8x8xi32>
      %38 = vector.broadcast %35 : i32 to vector<8x8xi32>
      %39 = arith.addi %36, %38 : vector<8x8xi32>
      %40 = arith.cmpi eq, %37, %39 : vector<8x8xi32>
      %cst_20 = arith.constant 0.000000e+00 : f32
      %41 = vector.broadcast %cst_20 : f32 to vector<8x8xf32>
      %42 = arith.select %40, %5, %41 : vector<8x8xi1>, vector<8x8xf32>
      %cst_21 = arith.constant dense<0.000000e+00> : vector<8xf32>
      %43 = vector.multi_reduction <add>, %42, %cst_21 [1] : vector<8x8xf32> to vector<8xf32>
      %44 = vector.shape_cast %43 : vector<8xf32> to vector<8x1xf32>
      %c0_22 = arith.constant 0 : index
      %c0_23 = arith.constant 0 : index
      %45 = vector.load %arg8[%c0_22, %c0_23] : memref<8x1xf32, #tpu.memory_space<vmem>>, vector<8x1xf32>
      tpu.vector_store %arg8[%c0_22, %c0_23], %44 {strides = array<i32>} : memref<8x1xf32, #tpu.memory_space<vmem>>, vector<8x1xf32>,
    } else {
    }
    %c0_7 = arith.constant 0 : index
    %c0_8 = arith.constant 0 : index
    %15 = vector.load %arg6[%c0_7, %c0_8] : memref<8x1xf32, #tpu.memory_space<vmem>>, vector<8x1xf32>
    %cst_9 = arith.constant dense<0xFF800000> : vector<8xf32>
    %16 = vector.multi_reduction <maximumf>, %5, %cst_9 [1] : vector<8x8xf32> to vector<8xf32>
    %17 = vector.shape_cast %16 : vector<8xf32> to vector<8x1xf32>
    %18 = arith.maximumf %15, %17 : vector<8x1xf32>
    %c0_10 = arith.constant 0 : index
    %c0_11 = arith.constant 0 : index
    %19 = vector.load %arg7[%c0_10, %c0_11] : memref<8x1xf32, #tpu.memory_space<vmem>>, vector<8x1xf32>
    %20 = arith.subf %15, %18 : vector<8x1xf32>
    %21 = math.exp2 %20 : vector<8x1xf32>
    %22 = arith.mulf %19, %21 : vector<8x1xf32>
    %23 = vector.broadcast %18 : vector<8x1xf32> to vector<8x8xf32>
    %24 = arith.subf %5, %23 : vector<8x8xf32>
    %25 = math.exp2 %24 : vector<8x8xf32>
    %cst_12 = arith.constant dense<0.000000e+00> : vector<8xf32>
    %26 = vector.multi_reduction <add>, %25, %cst_12 [1] : vector<8x8xf32> to vector<8xf32>
    %27 = vector.shape_cast %26 : vector<8xf32> to vector<8x1xf32>
    %28 = arith.addf %22, %27 : vector<8x1xf32>
    %c0_13 = arith.constant 0 : index
    %c0_14 = arith.constant 0 : index
    %29 = vector.load %arg7[%c0_13, %c0_14] : memref<8x1xf32, #tpu.memory_space<vmem>>, vector<8x1xf32>
    tpu.vector_store %arg7[%c0_13, %c0_14], %28 {strides = array<i32>} : memref<8x1xf32, #tpu.memory_space<vmem>>, vector<8x1xf32>,
    %c0_15 = arith.constant 0 : index
    %c0_16 = arith.constant 0 : index
    %30 = vector.load %arg6[%c0_15, %c0_16] : memref<8x1xf32, #tpu.memory_space<vmem>>, vector<8x1xf32>
    tpu.vector_store %arg6[%c0_15, %c0_16], %18 {strides = array<i32>} : memref<8x1xf32, #tpu.memory_space<vmem>>, vector<8x1xf32>,
    %c0_i32_17 = arith.constant 0 : i32
    %31 = arith.cmpi eq, %arg1, %c0_i32_17 : i32
    %32 = arith.extui %31 : i1 to i32
    %c0_i32_18 = arith.constant 0 : i32
    %33 = arith.cmpi ne, %32, %c0_i32_18 : i32
    scf.if %33 {
      %c0_19 = arith.constant 0 : index
      %c0_20 = arith.constant 0 : index
      %34 = vector.load %arg6[%c0_19, %c0_20] : memref<8x1xf32, #tpu.memory_space<vmem>>, vector<8x1xf32>
      %c0_21 = arith.constant 0 : index
      %c0_22 = arith.constant 0 : index
      %35 = vector.load %arg8[%c0_21, %c0_22] : memref<8x1xf32, #tpu.memory_space<vmem>>, vector<8x1xf32>
      %36 = arith.subf %34, %35 : vector<8x1xf32>
      %cst_23 = arith.constant 0.693147182 : f32
      %37 = vector.broadcast %cst_23 : f32 to vector<8x1xf32>
      %38 = arith.mulf %37, %36 : vector<8x1xf32>
      %c0_24 = arith.constant 0 : index
      %c0_25 = arith.constant 0 : index
      %39 = vector.load %arg7[%c0_24, %c0_25] : memref<8x1xf32, #tpu.memory_space<vmem>>, vector<8x1xf32>
      %40 = math.log %39 : vector<8x1xf32>
      %41 = arith.addf %38, %40 : vector<8x1xf32>
      %c0_26 = arith.constant 0 : index
      %c0_27 = arith.constant 0 : index
      %42 = vector.load %arg4[%c0_26, %c0_27] : memref<8x1xf32, #tpu.memory_space<vmem>>, vector<8x1xf32>
      tpu.vector_store %arg4[%c0_26, %c0_27], %41 {strides = array<i32>} : memref<8x1xf32, #tpu.memory_space<vmem>>, vector<8x1xf32>,
    } else {
    }
    return
  }
  func.func @transform_0(%arg0: i32, %arg1: i32) -> (i32, i32) {
    %c0_i32 = arith.constant 0 : i32
    %c0_i32_0 = arith.constant 0 : i32
    return %arg0, %c0_i32 : i32, i32
  }
  func.func @transform_1(%arg0: i32, %arg1: i32) -> (i32, i32) {
    %c0_i32 = arith.constant 0 : i32
    %c0_i32_0 = arith.constant 0 : i32
    return %arg1, %c0_i32 : i32, i32
  }
  func.func @transform_2(%arg0: i32, %arg1: i32) -> (i32, i32) {
    %c0_i32 = arith.constant 0 : i32
    %c0_i32_0 = arith.constant 0 : i32
    return %arg0, %c0_i32 : i32, i32
  }
}

</mosaic_0001>

<llo_original>
// kernel: tpu_custom_call.1
$region0: #{tpu_custom_call.1}
  #allocation0 [shape = 'u32[]', space=smem, size = 0x4, offset = 0x4, fixed_abs, tag = 'smem constant byte address 0x4 - core index']
  #allocation1 [shape = 'u32[144,128]{1,0:T(1,128)}', space=vmem, size = 0x12000, scoped, tag = 'internal scratch']
  #allocation2 [shape = 'f32[8,32]{1,0:T(8,128)}', space=vmem, size = 0x1000, scoped, tag = 'scratch operand']
  #allocation3 [shape = 'f32[8,1]{1,0:T(8,128)}', space=vmem, size = 0x1000, scoped, tag = 'scratch operand']
  #allocation4 [shape = 'f32[8,1]{1,0:T(8,128)}', space=vmem, size = 0x1000, scoped, tag = 'scratch operand']
  #allocation5 [shape = 'f32[8,1]{1,0:T(8,128)}', space=vmem, size = 0x1000, scoped, tag = 'scratch operand']
  %s0 = inlined_call_operand.hbm [shape: f32[8,32], index: 0, kind: input, shape index: {}]
  %s1 = inlined_call_operand.hbm [shape: f32[8,32], index: 1, kind: input, shape index: {}]
  %s2 = inlined_call_operand.vmem [shape: f32[8,1], index: 2, kind: output, shape index: {}]
  %s3 = sld [smem:[#allocation0]]
  $region38: #{tpu_custom_call.1} parent=0
    _
  %s5 = ssub.s32 1, %s3
  %s6 = scalar_select 0, %s5, %s3
  $region1: #{tpu_custom_call.1} parent=0
    #allocation6 [shape = 'u8[4096]{0}', space=vmem, size = 0x1000, scoped, tag = 'input window, operand 0, single buffered']
    #allocation7 [shape = 's32[1]{0}', space=sflag, size = 0x4, scoped, tag = 'scoped memory for tpu_custom_call.1']
    #allocation8 [shape = 'u8[4096]{0}', space=vmem, size = 0x1000, scoped, tag = 'input window, operand 1, single buffered']
    #allocation9 [shape = 's32[1]{0}', space=sflag, size = 0x4, scoped, tag = 'scoped memory for tpu_custom_call.1']
    %7 = vsyncpa [#allocation7], 0
    %8 = vsyncpa [#allocation9], 0
    // Predicated region
    $region2: #{tpu_custom_call.1} parent=1 // pred_check
      _
    $region3: #{tpu_custom_call.1} parent=1 // pred_check_branch
      %10 = sbr.rel (0) target = $region5
    $region4: #{tpu_custom_call.1} parent=1 // pred_region
      %s12 = ssub.s32 128, 128
      %13 = vsyncadd [#allocation7], %s12
      %s15 = sshll.u32 [#allocation6], 4
      %s16 = int_to_ptr.vmem [resolvable:$true] %s15
      %18 = dma.hbm_to_vmem [thread:$0]  %s0, 128, %s16, [#allocation7]
    $region5: #{tpu_custom_call.1} parent=1 // pred_fallthru
      _
    // Predicated region
    $region6: #{tpu_custom_call.1} parent=1 // pred_check
      _
    $region7: #{tpu_custom_call.1} parent=1 // pred_check_branch
      %20 = sbr.rel (0) target = $region9
    $region8: #{tpu_custom_call.1} parent=1 // pred_region
      %s22 = ssub.s32 128, 128
      %23 = vsyncadd [#allocation9], %s22
      %s25 = sshll.u32 [#allocation8], 4
      %s26 = int_to_ptr.vmem [resolvable:$true] %s25
      %28 = dma.hbm_to_vmem [thread:$0]  %s1, 128, %s26, [#allocation9]
    $region9: #{tpu_custom_call.1} parent=1 // pred_fallthru
      _
    // Predicated region
    $region10: #{tpu_custom_call.1} parent=1 // pred_check
      _
    $region11: #{tpu_custom_call.1} parent=1 // pred_check_branch
      %30 = sbr.rel (0) target = $region13
    $region12: #{tpu_custom_call.1} parent=1 // pred_region
      %31 = dma.done [#allocation7], 128
    $region13: #{tpu_custom_call.1} parent=1 // pred_fallthru
      _
    // Predicated region
    $region14: #{tpu_custom_call.1} parent=1 // pred_check
      _
    $region15: #{tpu_custom_call.1} parent=1 // pred_check_branch
      %33 = sbr.rel (0) target = $region17
    $region16: #{tpu_custom_call.1} parent=1 // pred_region
      %34 = dma.done [#allocation9], 128
    $region17: #{tpu_custom_call.1} parent=1 // pred_fallthru
      _
    %p35 = scmp.eq.s32.totalorder 0, 0
    // Predicated region
    $region18: #{tpu_custom_call.1} parent=1 // pred_check
      %p36 = pneg %p35
    $region19: #{tpu_custom_call.1} parent=1 // pred_check_branch
      %38 = sbr.rel (%p36) target = $region21
    $region20: #{tpu_custom_call.1} parent=1 // pred_region
      %vm39 = vcmask 7168
      %40 = vst.msk [vmem:[#allocation3] sm:$0xff] %vm39, -1e+30
      %41 = vst.msk [vmem:[#allocation4] sm:$0xff] %vm39, 0.0
      %42 = vst.msk [vmem:[#allocation5] sm:$0xff] %vm39, 0.0
      %v43 = vld [vmem:[#allocation6] sm:$0xff]
      %v44 = vmul.f32 %v43, %v43
      %vm45 = vcmask 261120
      %v46 = vsel %vm45, %v44, 0.0
      %47 = vadd.xlane.f32.xlu0 %v46
      %v48 = vpop.xlane.xlu0 %47
      %v49 = vmax.f32 %v48, 1e-24
      %v50 = vrsqrt.pop %v49
      %v51 = vmul.f32 %v50, 14.42695
      %v52 = vmul.f32 %v43, %v51
      %53 = vst.msk [vmem:[#allocation2] sm:$0xff] %vm45, %v52
    $region21: #{tpu_custom_call.1} parent=1 // pred_fallthru
      _
    %v54 = vld [vmem:[#allocation2] sm:$0xff]
    %v55 = vld [vmem:[#allocation8] sm:$0xff]
    %vm56 = vcmask 261120
    %v58 = vsel %vm56, %v54, 0
    %v61 = vsel %vm56, %v55, 0
    %63 = vmatprep.subr.mxu0 0.0
    %64 = vmatpush1.xpose.msra.mxu0 0.0
    %65 = vmatprep.subr.mxu0 0.0
    %66 = vmatpush1.xpose.msra.mxu0 0.0
    %67 = vmatprep.subr.mxu0 0.0
    %68 = vmatpush1.xpose.msra.mxu0 0.0
    %69 = vmatprep.subr.mxu0 0.0
    %70 = vmatpush1.xpose.msra.mxu0 0.0
    %71 = vmatprep.subr.mxu0 0.0
    %72 = vmatpush1.xpose.msra.mxu0 0.0
    %73 = vmatprep.subr.mxu0 0.0
    %74 = vmatpush1.xpose.msra.mxu0 0.0
    %75 = vmatprep.subr.mxu0 0.0
    %76 = vmatpush1.xpose.msra.mxu0 0.0
    %77 = vmatprep.subr.mxu0 0.0
    %78 = vmatpush1.xpose.msra.mxu0 0.0
    %79 = vmatprep.subr.mxu0 0.0
    %80 = vmatpush1.xpose.msra.mxu0 0.0
    %81 = vmatprep.subr.mxu0 0.0
    %82 = vmatpush1.xpose.msra.mxu0 0.0
    %83 = vmatprep.subr.mxu0 0.0
    %84 = vmatpush1.xpose.msra.mxu0 0.0
    %85 = vmatprep.subr.mxu0 0.0
    %86 = vmatpush1.xpose.msra.mxu0 0.0
    %87 = vmatprep.subr.mxu0 0.0
    %88 = vmatpush1.xpose.msra.mxu0 0.0
    %89 = vmatprep.subr.mxu0 0.0
    %90 = vmatpush1.xpose.msra.mxu0 0.0
    %91 = vmatprep.subr.mxu0 0.0
    %92 = vmatpush1.xpose.msra.mxu0 0.0
    %93 = vmatprep.subr.mxu0 0.0
    %94 = vmatpush1.xpose.msra.mxu0 %v61
    %95 = vmatprep.subr.mxu0 0.0
    %96 = vmatpush2.xpose.msra.mxu0 0.0
    %97 = vmatprep.subr.mxu0 0.0
    %98 = vmatpush2.xpose.msra.mxu0 0.0
    %99 = vmatprep.subr.mxu0 0.0
    %100 = vmatpush2.xpose.msra.mxu0 0.0
    %101 = vmatprep.subr.mxu0 0.0
    %102 = vmatpush2.xpose.msra.mxu0 0.0
    %103 = vmatprep.subr.mxu0 0.0
    %104 = vmatpush2.xpose.msra.mxu0 0.0
    %105 = vmatprep.subr.mxu0 0.0
    %106 = vmatpush2.xpose.msra.mxu0 0.0
    %107 = vmatprep.subr.mxu0 0.0
    %108 = vmatpush2.xpose.msra.mxu0 0.0
    %109 = vmatprep.subr.mxu0 0.0
    %110 = vmatpush2.xpose.msra.mxu0 0.0
    %111 = vmatprep.subr.mxu0 0.0
    %112 = vmatpush2.xpose.msra.mxu0 0.0
    %113 = vmatprep.subr.mxu0 0.0
    %114 = vmatpush2.xpose.msra.mxu0 0.0
    %115 = vmatprep.subr.mxu0 0.0
    %116 = vmatpush2.xpose.msra.mxu0 0.0
    %117 = vmatprep.subr.mxu0 0.0
    %118 = vmatpush2.xpose.msra.mxu0 0.0
    %119 = vmatprep.subr.mxu0 0.0
    %120 = vmatpush2.xpose.msra.mxu0 0.0
    %121 = vmatprep.subr.mxu0 0.0
    %122 = vmatpush2.xpose.msra.mxu0 0.0
    %123 = vmatprep.subr.mxu0 0.0
    %124 = vmatpush2.xpose.msra.mxu0 0.0
    %125 = vmatprep.subr.mxu0 0.0
    %126 = vmatpush2.xpose.msra.mxu0 0.0
    %127 = vmatprep.mubr.f32.mxu0 0.0
    %128 = vmatmul.mubr.f32.gmra.mxu0 %v58
    %v129 = vpop.f32.mrf.mxu0
    %v130 = vadd.f32 0.0, %v129
    %v131 = vpop.f32.mrf.mxu0
    %132 = vdwg.mxu0
    %s133 = smul.u32 0, 8
    %s134 = smul.u32 0, 8
    %p135 = scmp.ge.s32.totalorder %s133, %s134
    %s136 = sadd.s32 0, 1
    %s137 = smul.u32 %s136, 8
    %p138 = scmp.lt.s32.totalorder %s133, %s137
    %p139 = pnand %p135, %p138
    %p140 = pneg %p139
    // Predicated region
    $region22: #{tpu_custom_call.1} parent=1 // pred_check
      _
    $region23: #{tpu_custom_call.1} parent=1 // pred_check_branch
      %142 = sbr.rel (%p139) target = $region25
    $region24: #{tpu_custom_call.1} parent=1 // pred_region
      %s143 = ssub.s32 %s133, %s134
      %v144 = vlaneseq
      %v145 = vshrl.u32 %v144, 7
      %v146 = vlaneseq
      %v147 = vand.u32 %v146, 127
      %v148 = vstv %s143
      %v149 = vadd.s32 %v145, %v148
      %vm150 = vcmp.eq.s32.totalorder %v147, %v149
      %v151 = vsel %vm150, %v130, 0.0
      %vm152 = vcmask 64512
      %v153 = vsel %vm152, %v151, 0.0
      %154 = vadd.xlane.f32.xlu0 %v153
      %v155 = vpop.xlane.xlu0 %154
      %vm156 = vcmask 7168
      %157 = vst.msk [vmem:[#allocation5] sm:$0xff] %vm156, %v155
    $region25: #{tpu_custom_call.1} parent=1 // pred_fallthru
      _
    %v158 = vld [vmem:[#allocation3] sm:$0xff]
    %vm159 = vcmask 64512
    %v160 = vsel %vm159, %v130, -inf
    %161 = vmax.xlane.f32.xlu0 %v160
    %v162 = vpop.xlane.xlu0 %161
    %v163 = vmax.f32 %v158, %v162
    %v164 = vld [vmem:[#allocation4] sm:$0xff]
    %v165 = vsub.f32 %v158, %v163
    %v166 = vpow.pop %v165
    %v167 = vmul.f32 %v164, %v166
    %169 = vset.pattern.permute.xlu0 0
    %170 = vperm.xlu0 %169, %v163
    %v171 = vpop.permute.xlu0 %170
    %v173 = vsub.f32 %v130, %v171
    %v174 = vpow.pop %v173
    %v175 = vsel %vm159, %v174, 0.0
    %176 = vadd.xlane.f32.xlu0 %v175
    %v177 = vpop.xlane.xlu0 %176
    %v178 = vadd.f32 %v167, %v177
    %vm179 = vcmask 7168
    %180 = vst.msk [vmem:[#allocation4] sm:$0xff] %vm179, %v178
    %181 = vst.msk [vmem:[#allocation3] sm:$0xff] %vm179, %v163
    // Predicated region
    $region26: #{tpu_custom_call.1} parent=1 // pred_check
      %p182 = pneg %p35
    $region27: #{tpu_custom_call.1} parent=1 // pred_check_branch
      %184 = sbr.rel (%p182) target = $region29
    $region28: #{tpu_custom_call.1} parent=1 // pred_region
      %v185 = vld [vmem:[#allocation3] sm:$0xff]
      %v186 = vld [vmem:[#allocation5] sm:$0xff]
      %v187 = vsub.f32 %v185, %v186
      %v188 = vmul.f32 %v187, 0.6931472
      %v189 = vld [vmem:[#allocation4] sm:$0xff]
      %v190 = vlog2.pop %v189
      %v191 = vmul.f32 %v190, 0.6931472
      %v192 = vadd.f32 %v188, %v191
      %193 = vst.msk [vmem:[%s2] sm:$0xff] %vm179, %v192
    $region29: #{tpu_custom_call.1} parent=1 // pred_fallthru
      _
    // Predicated region
    $region30: #{tpu_custom_call.1} parent=1 // pred_check
      _
    $region31: #{tpu_custom_call.1} parent=1 // pred_check_branch
      %195 = sbr.rel (0) target = $region33
    $region32: #{tpu_custom_call.1} parent=1 // pred_region
      _
    $region33: #{tpu_custom_call.1} parent=1 // pred_fallthru
      _
    // Predicated region
    $region34: #{tpu_custom_call.1} parent=1 // pred_check
      _
    $region35: #{tpu_custom_call.1} parent=1 // pred_check_branch
      %197 = sbr.rel (0) target = $region37
    $region36: #{tpu_custom_call.1} parent=1 // pred_region
      _
    $region37: #{tpu_custom_call.1} parent=1 // pred_fallthru
      _
    %198 = vsyncpa [#allocation7], 1
    %199 = vsyncpa [#allocation9], 1

</llo_original>
